<compile_context>
chip_gen: v5e
topology: v5e:2x2
jax: 0.10.0
libtpu: 0.0.40
codegen_flags: <defaults>
</compile_context>

<pallas_src>
import functools

import jax
import jax.numpy as jnp
from jax import lax
from jax.experimental import pallas as pl
from jax.experimental.pallas import tpu as pltpu


def _shared_transformer_kernel(
    x_ref, rel_ref,
    conv1_w_ref, bn1_b_ref,
    proj_w_ref, v_b_ref,
    trans_w_ref, trans_b_ref,
    fuse_wa_t_ref, fuse_wb_t_ref, fbn_b_t_ref,
    out_ref,
    x_s, xq_s, xv_s, acc_s,
    *, c, tq,
):
    qt = pl.program_id(1)
    nqt = pl.num_programs(1)

    # ---------- once per batch element: conv1 + fused [v | qk] projection ----------
    @pl.when(qt == 0)
    def _init():
        x_cn = x_ref[0].astype(jnp.bfloat16)                          # (Cin, N)
        # conv1 (1x1, BN scale folded): contract the Cin axis of both operands.
        x = lax.dot_general(x_cn, conv1_w_ref[...],
                            (((0,), (0,)), ((), ())),
                            preferred_element_type=jnp.float32)       # (N, C)
        x = jnp.maximum(x + bn1_b_ref[...], 0.0)
        x_s[...] = x
        # Fused projection: one MXU pass produces [x_v | x_q].
        xp = jnp.dot(x.astype(jnp.bfloat16), proj_w_ref[...],
                     preferred_element_type=jnp.float32)              # (N, C + C/4)
        xv_s[:, :c] = xp[:, :c] + v_b_ref[...]                        # x_v
        xv_s[:, c:] = jnp.ones((xv_s.shape[0], 1), jnp.float32)       # colsum column
        xq_s[...] = xp[:, c:].astype(jnp.bfloat16)                    # xq (q/k share W)
        acc_s[...] = jnp.zeros_like(acc_s)

    # ---------- per query tile: energy -> softmax -> accumulate p^T @ [x_v*r | r] ----------
    q0 = pl.multiple_of(qt * tq, tq)
    xq_tile = xq_s[pl.ds(q0, tq), :]                                  # (TQ, C/4) bf16
    energy = lax.dot_general(xq_tile, xq_s[...],
                             (((1,), (1,)), ((), ())),
                             preferred_element_type=jnp.float32)      # (TQ, N)
    e = energy + rel_ref[0]                                           # f32 add with rel_pos
    e = e - jnp.max(e, axis=-1, keepdims=True)
    p = jnp.exp(e)                                                    # (TQ, N) f32
    r = pl.reciprocal(jnp.sum(p, axis=-1, keepdims=True), approx=True)  # (TQ, 1)
    # Row-softmax normalization folded into x_v; trailing ones column * r becomes
    # the attention column-sum after the contraction.
    xv_aug = (xv_s[pl.ds(q0, tq), :] * r).astype(jnp.bfloat16)        # (TQ, C+1)
    acc_s[...] += lax.dot_general(p.astype(jnp.bfloat16), xv_aug,
                                  (((0,), (0,)), ((), ())),
                                  preferred_element_type=jnp.float32)  # (N, C+1)

    # ---------- once per batch element: column norm, trans_conv, residual, fuse ----------
    @pl.when(qt == nqt - 1)
    def _finalize():
        x = x_s[...]
        x_r = acc_s[:, :c] * pl.reciprocal(1e-9 + acc_s[:, c:], approx=True)   # (N, C)
        t = jnp.dot((x - x_r).astype(jnp.bfloat16), trans_w_ref[...],
                    preferred_element_type=jnp.float32) + trans_b_ref[...]
        x1 = x + jnp.maximum(t, 0.0)                                  # residual + ReLU
        # concat([x, x1]) @ fuse_w == x @ Wa + x1 @ Wb; computed transposed against
        # pre-transposed weights so the store is lane-dense (C, N).
        y_t = lax.dot_general(fuse_wa_t_ref[...], x.astype(jnp.bfloat16),
                              (((1,), (1,)), ((), ())),
                              preferred_element_type=jnp.float32)     # (C, N)
        y_t = y_t + lax.dot_general(fuse_wb_t_ref[...], x1.astype(jnp.bfloat16),
                                    (((1,), (1,)), ((), ())),
                                    preferred_element_type=jnp.float32)
        y_t = y_t + fbn_b_t_ref[...]
        out_ref[0] = jnp.where(y_t > 0, y_t, 0.2 * y_t)               # LeakyReLU(0.2)


def _pick_tq(n, target=256):
    """Largest query-tile <= target (multiple of 16) that divides n; else full n."""
    if n <= target:
        return n
    for t in range(target, 15, -16):
        if n % t == 0:
            return t
    return n


def _const_spec(shape):
    rank = len(shape)
    return pl.BlockSpec(shape, lambda b, q, _r=rank: (0,) * _r)


def shared_transformer_pallas(inputs_ncl, rel_pos, params, *, tq=None):
    """inputs_ncl: (B, C_in, N) f32 (PyTorch NCL layout), rel_pos: (B, N, N) f32.

    Returns (B, C_out, N) f32."""
    B, Cin, N = inputs_ncl.shape
    C = params["conv1_w"].shape[1]
    C4 = params["qk_w"].shape[1]
    if tq is None:
        tq = _pick_tq(N)
    assert N % tq == 0
    nqt = N // tq

    bf16 = jnp.bfloat16
    # --- wrapper-side weight prep: BN folding, q/k+v fusion, bf16 cast, transposes ---
    conv1_w = (params["conv1_w"] * params["bn1_s"]).astype(bf16)            # (Cin, C)
    bn1_b = params["bn1_b"]                                                 # (1, C) f32
    proj_w = jnp.concatenate([params["v_w"], params["qk_w"]],
                             axis=1).astype(bf16)                           # (C, C + C/4)
    v_b = params["v_b"]                                                     # (1, C) f32
    trans_w = (params["trans_w"] * params["an_s"]).astype(bf16)             # (C, C)
    trans_b = params["trans_b"] * params["an_s"] + params["an_b"]           # (1, C) f32
    fuse_wa_t = (params["fuse_w"][:C] * params["fbn_s"]).T.astype(bf16)     # (C_out, C_in)
    fuse_wb_t = (params["fuse_w"][C:] * params["fbn_s"]).T.astype(bf16)     # (C_out, C_in)
    fbn_b_t = params["fbn_b"].T                                             # (C, 1) f32

    weights = [conv1_w, bn1_b, proj_w, v_b, trans_w, trans_b,
               fuse_wa_t, fuse_wb_t, fbn_b_t]

    in_specs = [
        pl.BlockSpec((1, Cin, N), lambda b, q: (b, 0, 0)),   # native NCL input
        pl.BlockSpec((1, tq, N), lambda b, q: (b, q, 0)),    # rel_pos query tile
    ] + [_const_spec(w.shape) for w in weights]
    out_specs = pl.BlockSpec((1, C, N), lambda b, q: (b, 0, 0))

    kernel = functools.partial(_shared_transformer_kernel, c=C, tq=tq)

    flops = 2 * B * (N * Cin * C + N * C * (C + C4) + N * N * C4
                     + N * N * (C + 1) + N * C * C + 2 * N * C * C)
    bytes_accessed = (4 * B * (Cin * N + N * N + C * N)
                      + sum(int(w.size) * w.dtype.itemsize for w in weights))
    cost = pl.CostEstimate(flops=int(flops), transcendentals=int(B * N * N),
                           bytes_accessed=int(bytes_accessed))

    grid_spec = pltpu.PrefetchScalarGridSpec(
        num_scalar_prefetch=0,
        grid=(B, nqt),
        in_specs=in_specs,
        out_specs=out_specs,
        scratch_shapes=[
            pltpu.VMEM((N, C), jnp.float32),        # x (post conv1 + relu)
            pltpu.VMEM((N, C4), jnp.bfloat16),      # xq (shared q/k projection)
            pltpu.VMEM((N, C + 1), jnp.float32),    # [x_v | 1]
            pltpu.VMEM((N, C + 1), jnp.float32),    # [x_r accumulator | colsum]
        ],
    )

    return pl.pallas_call(
        kernel,
        out_shape=jax.ShapeDtypeStruct((B, C, N), jnp.float32),
        grid_spec=grid_spec,
        compiler_params=pltpu.CompilerParams(
            dimension_semantics=("parallel", "arbitrary"),
            vmem_limit_bytes=48 * 1024 * 1024,   # above default scoped limit, fits v7x/64MiB
        ),
        cost_estimate=cost,
    )(inputs_ncl, rel_pos, *weights)


# ----------------------------- test utilities -----------------------------

def _fold_bn(key, c, eps=1e-5):
    k1, k2, k3, k4 = jax.random.split(key, 4)
    gamma = 1.0 + 0.1 * jax.random.normal(k1, (1, c), jnp.float32)
    beta = 0.1 * jax.random.normal(k2, (1, c), jnp.float32)
    mean = 0.1 * jax.random.normal(k3, (1, c), jnp.float32)
    var = jnp.abs(jax.random.normal(k4, (1, c), jnp.float32)) + 0.5
    scale = gamma / jnp.sqrt(var + eps)
    bias = beta - mean * scale
    return scale, bias


def make_params(key, c_in, c_out):
    ks = jax.random.split(key, 12)
    c4 = c_out // 4
    p = {}
    p["conv1_w"] = 0.1 * jax.random.normal(ks[0], (c_in, c_out), jnp.float32)
    p["bn1_s"], p["bn1_b"] = _fold_bn(ks[1], c_out)
    p["qk_w"] = 0.1 * jax.random.normal(ks[2], (c_out, c4), jnp.float32)
    p["v_w"] = 0.1 * jax.random.normal(ks[3], (c_out, c_out), jnp.float32)
    p["v_b"] = 0.1 * jax.random.normal(ks[4], (1, c_out), jnp.float32)
    p["trans_w"] = 0.1 * jax.random.normal(ks[5], (c_out, c_out), jnp.float32)
    p["trans_b"] = 0.1 * jax.random.normal(ks[6], (1, c_out), jnp.float32)
    p["an_s"], p["an_b"] = _fold_bn(ks[7], c_out)
    p["fuse_w"] = 0.1 * jax.random.normal(ks[8], (2 * c_out, c_out), jnp.float32)
    p["fbn_s"], p["fbn_b"] = _fold_bn(ks[9], c_out)
    return p


def reference(inputs_ncl, rel_pos, p):
    """Pure-JAX f32 reference mirroring the PyTorch math (un-folded BN, explicit
    concat, exact divisions)."""
    x_in = jnp.transpose(inputs_ncl, (0, 2, 1))                 # (B, N, Cin)
    x = jnp.maximum(x_in @ p["conv1_w"] * p["bn1_s"] + p["bn1_b"], 0.0)
    xq = x @ p["qk_w"]
    energy = jnp.einsum("bnc,bmc->bnm", xq, xq)
    attn = jax.nn.softmax(energy + rel_pos, axis=-1)
    attn = attn / (1e-9 + attn.sum(axis=1, keepdims=True))
    x_v = x @ p["v_w"] + p["v_b"]
    x_r = jnp.einsum("bij,bic->bjc", attn, x_v)
    t = (x - x_r) @ p["trans_w"] + p["trans_b"]
    x_r = jnp.maximum(t * p["an_s"] + p["an_b"], 0.0)
    x1 = x + x_r
    cat = jnp.concatenate([x, x1], axis=-1)
    y = cat @ p["fuse_w"] * p["fbn_s"] + p["fbn_b"]
    y = jnp.where(y > 0, y, 0.2 * y)
    return jnp.transpose(y, (0, 2, 1))


if __name__ == "__main__":
    B, C_IN, C_OUT, N = 2, 4, 32, 16
    key = jax.random.PRNGKey(0)
    k_in, k_rel, k_par = jax.random.split(key, 3)

    inputs = jax.random.normal(k_in, (B, C_IN, N), jnp.float32)    # PyTorch NCL layout
    rel_pos = jax.random.normal(k_rel, (B, N, N), jnp.float32)
    params = make_params(k_par, C_IN, C_OUT)

    out = shared_transformer_pallas(inputs, rel_pos, params)
    out = jax.block_until_ready(out)

    ref = reference(inputs, rel_pos, params)
    assert out.shape == (B, C_OUT, N), out.shape
    # Tolerance accounts for bf16 MXU operands (f32 accumulation) and the
    # EUP approximate reciprocals in the two softmax normalizations.
    assert jnp.allclose(out, ref, atol=5e-2, rtol=5e-2), \
        float(jnp.max(jnp.abs(out - ref)))

    print("KERNEL_OK")
</pallas_src>

<mosaic_0001>
module attributes {stable_mosaic.version = 11 : i64} {
  func.func @_shared_transformer_kernel(%arg0: i32, %arg1: i32, %arg2: memref<1x4x16xf32, #tpu.memory_space<vmem>>, %arg3: memref<1x16x16xf32, #tpu.memory_space<vmem>>, %arg4: memref<4x32xbf16, #tpu.memory_space<vmem>>, %arg5: memref<1x32xf32, #tpu.memory_space<vmem>>, %arg6: memref<32x40xbf16, #tpu.memory_space<vmem>>, %arg7: memref<1x32xf32, #tpu.memory_space<vmem>>, %arg8: memref<32x32xbf16, #tpu.memory_space<vmem>>, %arg9: memref<1x32xf32, #tpu.memory_space<vmem>>, %arg10: memref<32x32xbf16, #tpu.memory_space<vmem>>, %arg11: memref<32x32xbf16, #tpu.memory_space<vmem>>, %arg12: memref<32x1xf32, #tpu.memory_space<vmem>>, %arg13: memref<1x32x16xf32, #tpu.memory_space<vmem>>, %arg14: memref<16x32xf32, #tpu.memory_space<vmem>>, %arg15: memref<16x8xbf16, #tpu.memory_space<vmem>>, %arg16: memref<16x33xf32, #tpu.memory_space<vmem>>, %arg17: memref<16x33xf32, #tpu.memory_space<vmem>>) attributes {dimension_semantics = [#tpu.dimension_semantics<parallel>, #tpu.dimension_semantics<arbitrary>], iteration_bounds = array<i64: 2, 1>, scalar_prefetch = 0 : i64, scratch_operands = 4 : i64, tpu.core_type = #tpu.core_type<tc>, window_params = [{transform_indices = @transform_0, window_bounds = array<i64: 1, 4, 16>}, {transform_indices = @transform_1, window_bounds = array<i64: 1, 16, 16>}, {pipeline_mode = #tpu.pipeline_mode<synchronous>, transform_indices = @transform_2, window_bounds = array<i64: 4, 32>}, {pipeline_mode = #tpu.pipeline_mode<synchronous>, transform_indices = @transform_3, window_bounds = array<i64: 1, 32>}, {pipeline_mode = #tpu.pipeline_mode<synchronous>, transform_indices = @transform_4, window_bounds = array<i64: 32, 40>}, {pipeline_mode = #tpu.pipeline_mode<synchronous>, transform_indices = @transform_5, window_bounds = array<i64: 1, 32>}, {pipeline_mode = #tpu.pipeline_mode<synchronous>, transform_indices = @transform_6, window_bounds = array<i64: 32, 32>}, {pipeline_mode = #tpu.pipeline_mode<synchronous>, transform_indices = @transform_7, window_bounds = array<i64: 1, 32>}, {pipeline_mode = #tpu.pipeline_mode<synchronous>, transform_indices = @transform_8, window_bounds = array<i64: 32, 32>}, {pipeline_mode = #tpu.pipeline_mode<synchronous>, transform_indices = @transform_9, window_bounds = array<i64: 32, 32>}, {pipeline_mode = #tpu.pipeline_mode<synchronous>, transform_indices = @transform_10, window_bounds = array<i64: 32, 1>}, {transform_indices = @transform_11, window_bounds = array<i64: 1, 32, 16>}]} {
    %c0_i32 = arith.constant 0 : i32
    %0 = arith.cmpi eq, %arg1, %c0_i32 : i32
    %1 = arith.extui %0 : i1 to i32
    %c0_i32_0 = arith.constant 0 : i32
    %2 = arith.cmpi ne, %1, %c0_i32_0 : i32
    scf.if %2 {
      %c0_16 = arith.constant 0 : index
      %c0_17 = arith.constant 0 : index
      %c0_18 = arith.constant 0 : index
      %33 = vector.load %arg2[%c0_16, %c0_17, %c0_18] : memref<1x4x16xf32, #tpu.memory_space<vmem>>, vector<1x4x16xf32>
      %34 = vector.shape_cast %33 : vector<1x4x16xf32> to vector<4x16xf32>
      %35 = arith.truncf %34 : vector<4x16xf32> to vector<4x16xbf16>
      %c0_19 = arith.constant 0 : index
      %c0_20 = arith.constant 0 : index
      %36 = vector.load %arg4[%c0_19, %c0_20] : memref<4x32xbf16, #tpu.memory_space<vmem>>, vector<4x32xbf16>
      %cst_21 = arith.constant dense<0.000000e+00> : vector<16x32xf32>
      %37 = tpu.matmul %35, %36, %cst_21 {dimension_numbers = #tpu.dot_dimension_numbers<[0], [0], [1], [1], [0, 1, 1, 1], [], []>} : vector<4x16xbf16>, vector<4x32xbf16>, vector<16x32xf32> -> vector<16x32xf32>
      %c0_22 = arith.constant 0 : index
      %c0_23 = arith.constant 0 : index
      %38 = vector.load %arg5[%c0_22, %c0_23] : memref<1x32xf32, #tpu.memory_space<vmem>>, vector<1x32xf32>
      %39 = vector.broadcast %38 : vector<1x32xf32> to vector<16x32xf32>
      %40 = arith.addf %37, %39 : vector<16x32xf32>
      %cst_24 = arith.constant 0.000000e+00 : f32
      %41 = vector.broadcast %cst_24 : f32 to vector<16x32xf32>
      %42 = arith.maximumf %40, %41 : vector<16x32xf32>
      %c0_25 = arith.constant 0 : index
      %c0_26 = arith.constant 0 : index
      %43 = vector.load %arg14[%c0_25, %c0_26] : memref<16x32xf32, #tpu.memory_space<vmem>>, vector<16x32xf32>
      tpu.vector_store %arg14[%c0_25, %c0_26], %42 {strides = array<i32>} : memref<16x32xf32, #tpu.memory_space<vmem>>, vector<16x32xf32>,
      %44 = arith.truncf %42 : vector<16x32xf32> to vector<16x32xbf16>
      %c0_27 = arith.constant 0 : index
      %c0_28 = arith.constant 0 : index
      %45 = vector.load %arg6[%c0_27, %c0_28] : memref<32x40xbf16, #tpu.memory_space<vmem>>, vector<32x40xbf16>
      %cst_29 = arith.constant dense<0.000000e+00> : vector<16x40xf32>
      %46 = tpu.matmul %44, %45, %cst_29 {dimension_numbers = #tpu.dot_dimension_numbers<[1], [0], [0], [1], [0, 0, 1, 1], [], []>} : vector<16x32xbf16>, vector<32x40xbf16>, vector<16x40xf32> -> vector<16x40xf32>
      %47 = vector.extract_strided_slice %46 {offsets = [0, 0], sizes = [16, 32], strides = [1, 1]} : vector<16x40xf32> to vector<16x32xf32>
      %c0_30 = arith.constant 0 : index
      %c0_31 = arith.constant 0 : index
      %48 = vector.load %arg7[%c0_30, %c0_31] : memref<1x32xf32, #tpu.memory_space<vmem>>, vector<1x32xf32>
      %49 = vector.broadcast %48 : vector<1x32xf32> to vector<16x32xf32>
      %50 = arith.addf %47, %49 : vector<16x32xf32>
      %c0_32 = arith.constant 0 : index
      %c0_33 = arith.constant 0 : index
      %51 = vector.load %arg16[%c0_32, %c0_33] : memref<16x33xf32, #tpu.memory_space<vmem>>, vector<16x32xf32>
      tpu.vector_store %arg16[%c0_32, %c0_33], %50 {strides = array<i32>} : memref<16x33xf32, #tpu.memory_space<vmem>>, vector<16x32xf32>,
      %cst_34 = arith.constant 1.000000e+00 : f32
      %52 = vector.broadcast %cst_34 : f32 to vector<16x1xf32>
      %c0_35 = arith.constant 0 : index
      %c32 = arith.constant 32 : index
      %53 = vector.load %arg16[%c0_35, %c32] : memref<16x33xf32, #tpu.memory_space<vmem>>, vector<16x1xf32>
      tpu.vector_store %arg16[%c0_35, %c32], %52 {strides = array<i32>} : memref<16x33xf32, #tpu.memory_space<vmem>>, vector<16x1xf32>,
      %54 = vector.extract_strided_slice %46 {offsets = [0, 32], sizes = [16, 8], strides = [1, 1]} : vector<16x40xf32> to vector<16x8xf32>
      %55 = arith.truncf %54 : vector<16x8xf32> to vector<16x8xbf16>
      %c0_36 = arith.constant 0 : index
      %c0_37 = arith.constant 0 : index
      %56 = vector.load %arg15[%c0_36, %c0_37] : memref<16x8xbf16, #tpu.memory_space<vmem>>, vector<16x8xbf16>
      tpu.vector_store %arg15[%c0_36, %c0_37], %55 {strides = array<i32>} : memref<16x8xbf16, #tpu.memory_space<vmem>>, vector<16x8xbf16>,
      %cst_38 = arith.constant 0.000000e+00 : f32
      %57 = vector.broadcast %cst_38 : f32 to vector<16x33xf32>
      %c0_39 = arith.constant 0 : index
      %c0_40 = arith.constant 0 : index
      %58 = vector.load %arg17[%c0_39, %c0_40] : memref<16x33xf32, #tpu.memory_space<vmem>>, vector<16x33xf32>
      tpu.vector_store %arg17[%c0_39, %c0_40], %57 {strides = array<i32>} : memref<16x33xf32, #tpu.memory_space<vmem>>, vector<16x33xf32>,
    } else {
    }
    %c16_i32 = arith.constant 16 : i32
    %3 = arith.muli %arg1, %c16_i32 : i32
    %4 = tpu.assume_multiple %3, 16 : i32
    %5 = arith.index_cast %4 : i32 to index
    %c0 = arith.constant 0 : index
    %6 = vector.load %arg15[%5, %c0] : memref<16x8xbf16, #tpu.memory_space<vmem>>, vector<16x8xbf16>
    %c0_1 = arith.constant 0 : index
    %c0_2 = arith.constant 0 : index
    %7 = vector.load %arg15[%c0_1, %c0_2] : memref<16x8xbf16, #tpu.memory_space<vmem>>, vector<16x8xbf16>
    %cst = arith.constant dense<0.000000e+00> : vector<16x16xf32>
    %8 = tpu.matmul %6, %7, %cst {dimension_numbers = #tpu.dot_dimension_numbers<[1], [1], [0], [0], [0, 0, 1, 0], [], []>} : vector<16x8xbf16>, vector<16x8xbf16>, vector<16x16xf32> -> vector<16x16xf32>
    %c0_3 = arith.constant 0 : index
    %c0_4 = arith.constant 0 : index
    %c0_5 = arith.constant 0 : index
    %9 = vector.load %arg3[%c0_3, %c0_4, %c0_5] : memref<1x16x16xf32, #tpu.memory_space<vmem>>, vector<1x16x16xf32>
    %10 = vector.shape_cast %9 : vector<1x16x16xf32> to vector<16x16xf32>
    %11 = arith.addf %8, %10 : vector<16x16xf32>
    %cst_6 = arith.constant dense<0xFF800000> : vector<16xf32>
    %12 = vector.multi_reduction <maximumf>, %11, %cst_6 [1] : vector<16x16xf32> to vector<16xf32>
    %13 = vector.shape_cast %12 : vector<16xf32> to vector<16x1xf32>
    %14 = vector.broadcast %13 : vector<16x1xf32> to vector<16x16xf32>
    %15 = arith.subf %11, %14 : vector<16x16xf32>
    %16 = math.exp %15 : vector<16x16xf32>
    %cst_7 = arith.constant dense<0.000000e+00> : vector<16xf32>
    %17 = vector.multi_reduction <add>, %16, %cst_7 [1] : vector<16x16xf32> to vector<16xf32>
    %18 = vector.shape_cast %17 : vector<16xf32> to vector<16x1xf32>
    %19 = tpu.reciprocal %18 {approx = true} : vector<16x1xf32> -> vector<16x1xf32>
    %20 = arith.index_cast %4 : i32 to index
    %c0_8 = arith.constant 0 : index
    %21 = vector.load %arg16[%20, %c0_8] : memref<16x33xf32, #tpu.memory_space<vmem>>, vector<16x33xf32>
    %22 = vector.broadcast %19 : vector<16x1xf32> to vector<16x33xf32>
    %23 = arith.mulf %21, %22 : vector<16x33xf32>
    %24 = arith.truncf %23 : vector<16x33xf32> to vector<16x33xbf16>
    %c0_9 = arith.constant 0 : index
    %c0_10 = arith.constant 0 : index
    %25 = vector.load %arg17[%c0_9, %c0_10] : memref<16x33xf32, #tpu.memory_space<vmem>>, vector<16x33xf32>
    %26 = arith.truncf %16 : vector<16x16xf32> to vector<16x16xbf16>
    %cst_11 = arith.constant dense<0.000000e+00> : vector<16x33xf32>
    %27 = tpu.matmul %26, %24, %cst_11 {dimension_numbers = #tpu.dot_dimension_numbers<[0], [0], [1], [1], [0, 1, 1, 1], [], []>} : vector<16x16xbf16>, vector<16x33xbf16>, vector<16x33xf32> -> vector<16x33xf32>
    %28 = arith.addf %25, %27 : vector<16x33xf32>
    %c0_12 = arith.constant 0 : index
    %c0_13 = arith.constant 0 : index
    %29 = vector.load %arg17[%c0_12, %c0_13] : memref<16x33xf32, #tpu.memory_space<vmem>>, vector<16x33xf32>
    tpu.vector_store %arg17[%c0_12, %c0_13], %28 {strides = array<i32>} : memref<16x33xf32, #tpu.memory_space<vmem>>, vector<16x33xf32>,
    %c0_i32_14 = arith.constant 0 : i32
    %30 = arith.cmpi eq, %arg1, %c0_i32_14 : i32
    %31 = arith.extui %30 : i1 to i32
    %c0_i32_15 = arith.constant 0 : i32
    %32 = arith.cmpi ne, %31, %c0_i32_15 : i32
    scf.if %32 {
      %c0_16 = arith.constant 0 : index
      %c0_17 = arith.constant 0 : index
      %33 = vector.load %arg14[%c0_16, %c0_17] : memref<16x32xf32, #tpu.memory_space<vmem>>, vector<16x32xf32>
      %c0_18 = arith.constant 0 : index
      %c0_19 = arith.constant 0 : index
      %34 = vector.load %arg17[%c0_18, %c0_19] : memref<16x33xf32, #tpu.memory_space<vmem>>, vector<16x32xf32>
      %c0_20 = arith.constant 0 : index
      %c32 = arith.constant 32 : index
      %35 = vector.load %arg17[%c0_20, %c32] : memref<16x33xf32, #tpu.memory_space<vmem>>, vector<16x1xf32>
      %cst_21 = arith.constant 9.99999971E-10 : f32
      %36 = vector.broadcast %cst_21 : f32 to vector<16x1xf32>
      %37 = arith.addf %36, %35 : vector<16x1xf32>
      %38 = tpu.reciprocal %37 {approx = true} : vector<16x1xf32> -> vector<16x1xf32>
      %39 = vector.broadcast %38 : vector<16x1xf32> to vector<16x32xf32>
      %40 = arith.mulf %34, %39 : vector<16x32xf32>
      %41 = arith.subf %33, %40 : vector<16x32xf32>
      %42 = arith.truncf %41 : vector<16x32xf32> to vector<16x32xbf16>
      %c0_22 = arith.constant 0 : index
      %c0_23 = arith.constant 0 : index
      %43 = vector.load %arg8[%c0_22, %c0_23] : memref<32x32xbf16, #tpu.memory_space<vmem>>, vector<32x32xbf16>
      %cst_24 = arith.constant dense<0.000000e+00> : vector<16x32xf32>
      %44 = tpu.matmul %42, %43, %cst_24 {dimension_numbers = #tpu.dot_dimension_numbers<[1], [0], [0], [1], [0, 0, 1, 1], [], []>} : vector<16x32xbf16>, vector<32x32xbf16>, vector<16x32xf32> -> vector<16x32xf32>
      %c0_25 = arith.constant 0 : index
      %c0_26 = arith.constant 0 : index
      %45 = vector.load %arg9[%c0_25, %c0_26] : memref<1x32xf32, #tpu.memory_space<vmem>>, vector<1x32xf32>
      %46 = vector.broadcast %45 : vector<1x32xf32> to vector<16x32xf32>
      %47 = arith.addf %44, %46 : vector<16x32xf32>
      %cst_27 = arith.constant 0.000000e+00 : f32
      %48 = vector.broadcast %cst_27 : f32 to vector<16x32xf32>
      %49 = arith.maximumf %47, %48 : vector<16x32xf32>
      %50 = arith.addf %33, %49 : vector<16x32xf32>
      %c0_28 = arith.constant 0 : index
      %c0_29 = arith.constant 0 : index
      %51 = vector.load %arg10[%c0_28, %c0_29] : memref<32x32xbf16, #tpu.memory_space<vmem>>, vector<32x32xbf16>
      %52 = arith.truncf %33 : vector<16x32xf32> to vector<16x32xbf16>
      %cst_30 = arith.constant dense<0.000000e+00> : vector<32x16xf32>
      %53 = tpu.matmul %51, %52, %cst_30 {dimension_numbers = #tpu.dot_dimension_numbers<[1], [1], [0], [0], [0, 0, 1, 0], [], []>} : vector<32x32xbf16>, vector<16x32xbf16>, vector<32x16xf32> -> vector<32x16xf32>
      %c0_31 = arith.constant 0 : index
      %c0_32 = arith.constant 0 : index
      %54 = vector.load %arg11[%c0_31, %c0_32] : memref<32x32xbf16, #tpu.memory_space<vmem>>, vector<32x32xbf16>
      %55 = arith.truncf %50 : vector<16x32xf32> to vector<16x32xbf16>
      %cst_33 = arith.constant dense<0.000000e+00> : vector<32x16xf32>
      %56 = tpu.matmul %54, %55, %cst_33 {dimension_numbers = #tpu.dot_dimension_numbers<[1], [1], [0], [0], [0, 0, 1, 0], [], []>} : vector<32x32xbf16>, vector<16x32xbf16>, vector<32x16xf32> -> vector<32x16xf32>
      %57 = arith.addf %53, %56 : vector<32x16xf32>
      %c0_34 = arith.constant 0 : index
      %c0_35 = arith.constant 0 : index
      %58 = vector.load %arg12[%c0_34, %c0_35] : memref<32x1xf32, #tpu.memory_space<vmem>>, vector<32x1xf32>
      %59 = vector.broadcast %58 : vector<32x1xf32> to vector<32x16xf32>
      %60 = arith.addf %57, %59 : vector<32x16xf32>
      %cst_36 = arith.constant 0.000000e+00 : f32
      %61 = vector.broadcast %cst_36 : f32 to vector<32x16xf32>
      %62 = arith.cmpf ogt, %60, %61 : vector<32x16xf32>
      %cst_37 = arith.constant 2.000000e-01 : f32
      %63 = vector.broadcast %cst_37 : f32 to vector<32x16xf32>
      %64 = arith.mulf %63, %60 : vector<32x16xf32>
      %65 = arith.select %62, %60, %64 : vector<32x16xi1>, vector<32x16xf32>
      %c0_38 = arith.constant 0 : index
      %c0_39 = arith.constant 0 : index
      %c0_40 = arith.constant 0 : index
      %66 = vector.load %arg13[%c0_38, %c0_39, %c0_40] : memref<1x32x16xf32, #tpu.memory_space<vmem>>, vector<1x32x16xf32>
      %67 = vector.shape_cast %66 : vector<1x32x16xf32> to vector<32x16xf32>
      %68 = vector.shape_cast %65 : vector<32x16xf32> to vector<1x32x16xf32>
      tpu.vector_store %arg13[%c0_38, %c0_39, %c0_40], %68 {strides = array<i32>} : memref<1x32x16xf32, #tpu.memory_space<vmem>>, vector<1x32x16xf32>,
    } else {
    }
    return
  }
  func.func @transform_0(%arg0: i32, %arg1: i32) -> (i32, i32, i32) {
    %c0_i32 = arith.constant 0 : i32
    %c0_i32_0 = arith.constant 0 : i32
    %c0_i32_1 = arith.constant 0 : i32
    return %arg0, %c0_i32, %c0_i32_0 : i32, i32, i32
  }
  func.func @transform_1(%arg0: i32, %arg1: i32) -> (i32, i32, i32) {
    %c0_i32 = arith.constant 0 : i32
    %c0_i32_0 = arith.constant 0 : i32
    return %arg0, %arg1, %c0_i32 : i32, i32, i32
  }
  func.func @transform_2(%arg0: i32, %arg1: i32) -> (i32, i32) {
    %c0_i32 = arith.constant 0 : i32
    %c0_i32_0 = arith.constant 0 : i32
    %c0_i32_1 = arith.constant 0 : i32
    return %c0_i32, %c0_i32_0 : i32, i32
  }
  func.func @transform_3(%arg0: i32, %arg1: i32) -> (i32, i32) {
    %c0_i32 = arith.constant 0 : i32
    %c0_i32_0 = arith.constant 0 : i32
    %c0_i32_1 = arith.constant 0 : i32
    return %c0_i32, %c0_i32_0 : i32, i32
  }
  func.func @transform_4(%arg0: i32, %arg1: i32) -> (i32, i32) {
    %c0_i32 = arith.constant 0 : i32
    %c0_i32_0 = arith.constant 0 : i32
    %c0_i32_1 = arith.constant 0 : i32
    return %c0_i32, %c0_i32_0 : i32, i32
  }
  func.func @transform_5(%arg0: i32, %arg1: i32) -> (i32, i32) {
    %c0_i32 = arith.constant 0 : i32
    %c0_i32_0 = arith.constant 0 : i32
    %c0_i32_1 = arith.constant 0 : i32
    return %c0_i32, %c0_i32_0 : i32, i32
  }
  func.func @transform_6(%arg0: i32, %arg1: i32) -> (i32, i32) {
    %c0_i32 = arith.constant 0 : i32
    %c0_i32_0 = arith.constant 0 : i32
    %c0_i32_1 = arith.constant 0 : i32
    return %c0_i32, %c0_i32_0 : i32, i32
  }
  func.func @transform_7(%arg0: i32, %arg1: i32) -> (i32, i32) {
    %c0_i32 = arith.constant 0 : i32
    %c0_i32_0 = arith.constant 0 : i32
    %c0_i32_1 = arith.constant 0 : i32
    return %c0_i32, %c0_i32_0 : i32, i32
  }
  func.func @transform_8(%arg0: i32, %arg1: i32) -> (i32, i32) {
    %c0_i32 = arith.constant 0 : i32
    %c0_i32_0 = arith.constant 0 : i32
    %c0_i32_1 = arith.constant 0 : i32
    return %c0_i32, %c0_i32_0 : i32, i32
  }
  func.func @transform_9(%arg0: i32, %arg1: i32) -> (i32, i32) {
    %c0_i32 = arith.constant 0 : i32
    %c0_i32_0 = arith.constant 0 : i32
    %c0_i32_1 = arith.constant 0 : i32
    return %c0_i32, %c0_i32_0 : i32, i32
  }
  func.func @transform_10(%arg0: i32, %arg1: i32) -> (i32, i32) {
    %c0_i32 = arith.constant 0 : i32
    %c0_i32_0 = arith.constant 0 : i32
    %c0_i32_1 = arith.constant 0 : i32
    return %c0_i32, %c0_i32_0 : i32, i32
  }
  func.func @transform_11(%arg0: i32, %arg1: i32) -> (i32, i32, i32) {
    %c0_i32 = arith.constant 0 : i32
    %c0_i32_0 = arith.constant 0 : i32
    %c0_i32_1 = arith.constant 0 : i32
    return %arg0, %c0_i32, %c0_i32_0 : i32, i32, i32
  }
}

</mosaic_0001>

<llo_original>
// kernel: tpu_custom_call.1
$region0: #{tpu_custom_call.1}
  #allocation0 [shape = 'u32[]', space=smem, size = 0x4, offset = 0x4, fixed_abs, tag = 'smem constant byte address 0x4 - core index']
  #allocation1 [shape = 'u32[72,128]{1,0:T(1,128)}', space=vmem, size = 0x9000, scoped, tag = 'internal scratch']
  #allocation2 [shape = 'f32[16,32]{1,0:T(8,128)}', space=vmem, size = 0x2000, scoped, tag = 'scratch operand']
  #allocation3 [shape = 'bf16[16,8]{1,0:T(8,128)(2,1)}', space=vmem, size = 0x1000, scoped, tag = 'scratch operand']
  #allocation4 [shape = 'f32[16,33]{1,0:T(8,128)}', space=vmem, size = 0x2000, scoped, tag = 'scratch operand']
  #allocation5 [shape = 'f32[16,33]{1,0:T(8,128)}', space=vmem, size = 0x2000, scoped, tag = 'scratch operand']
  %s0 = inlined_call_operand.hbm [shape: f32[2,4,16], index: 0, kind: input, shape index: {}]
  %s1 = inlined_call_operand.vmem [shape: f32[2,16,16], index: 1, kind: input, shape index: {}]
  %s2 = inlined_call_operand.vmem [shape: bf16[4,32], index: 2, kind: input, shape index: {}]
  %s3 = inlined_call_operand.hbm [shape: f32[1,32], index: 3, kind: input, shape index: {}]
  %s4 = inlined_call_operand.hbm [shape: bf16[32,40], index: 4, kind: input, shape index: {}]
  %s5 = inlined_call_operand.vmem [shape: f32[1,32], index: 5, kind: input, shape index: {}]
  %s6 = inlined_call_operand.hbm [shape: bf16[32,32], index: 6, kind: input, shape index: {}]
  %s7 = inlined_call_operand.vmem [shape: f32[1,32], index: 7, kind: input, shape index: {}]
  %s8 = inlined_call_operand.hbm [shape: bf16[32,32], index: 8, kind: input, shape index: {}]
  %s9 = inlined_call_operand.hbm [shape: bf16[32,32], index: 9, kind: input, shape index: {}]
  %s10 = inlined_call_operand.vmem [shape: f32[32,1], index: 10, kind: input, shape index: {}]
  %s11 = inlined_call_operand.vmem [shape: f32[2,32,16], index: 11, kind: output, shape index: {}]
  %s12 = sld [smem:[#allocation0]]
  $region109: #{tpu_custom_call.1} parent=0
    _
  %s14 = ssub.s32 1, %s12
  %s15 = scalar_select 0, %s14, %s12
  $region1: #{tpu_custom_call.1} parent=0
    #allocation6 [shape = 'u8[4096]{0}', space=vmem, size = 0x1000, scoped, tag = 'input window, operand 0']
    #allocation7 [shape = 's32[2]{0}', space=sflag, size = 0x8, scoped, tag = 'scoped memory for tpu_custom_call.1']
    #allocation8 [shape = 'u8[512]{0}', space=vmem, size = 0x400, scoped, tag = 'input window, operand 3, single buffered']
    #allocation9 [shape = 's32[1]{0}', space=sflag, size = 0x4, scoped, tag = 'scoped memory for tpu_custom_call.1']
    #allocation10 [shape = 'u8[8192]{0}', space=vmem, size = 0x2000, scoped, tag = 'input window, operand 4, single buffered']
    #allocation11 [shape = 'u8[8192]{0}', space=vmem, size = 0x2000, scoped, tag = 'input window, operand 6, single buffered']
    #allocation12 [shape = 's32[1]{0}', space=sflag, size = 0x4, scoped, tag = 'scoped memory for tpu_custom_call.1']
    #allocation13 [shape = 'u8[8192]{0}', space=vmem, size = 0x2000, scoped, tag = 'input window, operand 8, single buffered']
    #allocation14 [shape = 'u8[8192]{0}', space=vmem, size = 0x2000, scoped, tag = 'input window, operand 9, single buffered']
    #allocation15 [shape = 's32[1]{0}', space=sflag, size = 0x4, scoped, tag = 'scoped memory for tpu_custom_call.1']
    %16 = vsyncpa [#allocation7], 0
    %s17 = scalar_lea.sflag [#allocation7], 1
    %18 = vsyncpa %s17, 0
    %19 = vsyncpa [#allocation9], 0
    %20 = vsyncpa [#allocation12], 0
    %21 = vsyncpa [#allocation15], 0
    loop: start=0, step=1, limit=4
    $region2: #{tpu_custom_call.1} parent=1 // loop_pre_header
      _
    $region3: #{tpu_custom_call.1} parent=1 // loop_header
      %s23 = sphi 0, %s27
      %p24 = scmp.ge.s32.totalorder %s23, 4
      %s30 = sphi 0, %s42
      %s31 = sphi 0, %s38
      %s32 = sphi 0, %s30
      %s33 = sphi 0, %s31
      %s34 = sphi 0, %s32
      %s35 = sphi 0, %s33
      %s45 = sphi 0, %s47
      %s48 = sphi 0, %s45
      %s49 = sphi 0, %s48
      %s65 = sphi 0, %s49
      %s73 = sphi 0, %s75
      %s76 = sphi 0, %s73
      %s77 = sphi 0, %s76
      %s93 = sphi 0, %s77
      %s97 = sphi 0, %s97
      %s99 = sphi 0, %s97
      %s100 = sphi 0, %s99
      %s114 = sphi 0, %s100
      %s118 = sphi 0, %s118
      %s120 = sphi 0, %s118
      %s121 = sphi 0, %s120
      %s135 = sphi 0, %s121
      %s139 = sphi 0, %s139
      %s141 = sphi 0, %s139
      %s142 = sphi 0, %s141
      %s156 = sphi 0, %s142
      %s160 = sphi 0, %s160
      %s162 = sphi 0, %s160
      %s163 = sphi 0, %s162
      %s177 = sphi 0, %s163
      %s181 = sphi 0, %s181
      %s183 = sphi 0, %s181
      %s184 = sphi 0, %s183
      %s198 = sphi 0, %s184
      %s202 = sphi 0, %s202
      %s204 = sphi 0, %s202
      %s205 = sphi 0, %s204
      %s219 = sphi 0, %s205
      %s223 = sphi 0, %s223
      %s225 = sphi 0, %s223
      %s226 = sphi 0, %s225
      %s240 = sphi 0, %s226
      %s244 = sphi 0, %s244
      %s246 = sphi 0, %s244
      %s247 = sphi 0, %s246
      %s261 = sphi 0, %s247
      %s265 = sphi 0, %s265
      %s267 = sphi 0, %s265
      %s268 = sphi 0, %s267
      %s282 = sphi 0, %s268
      %s288 = sphi 0, %s290
      %s291 = sphi 0, %s288
      %s292 = sphi 0, %s291
      %s308 = sphi 0, %s292
    $region4: #{tpu_custom_call.1} parent=1 // loop_header_branch
      %26 = sbr.rel (%p24) target = $region8
    $region5: #{tpu_custom_call.1} parent=1 // loop_body
      %s28 = ssub.s32 %s23, 1
      %s29 = ssub.s32 %s23, 2
      %s36 = sadd.s32 1, %s31
      %p37 = scmp.ge.s32.totalorder %s36, 1
      %s38 = scalar_select %p37, 0, %s36
      %s39 = sadd.s32 1, %s30
      %s40 = scalar_select %p37, %s39, %s30
      %p41 = scmp.ge.s32.totalorder %s40, 2
      %s42 = scalar_select %p41, 0, %s40
      %s43 = ssub.s32 %s30, %s42
      %p44 = scmp.eq.s32.totalorder %s43, 0
      %s46 = sadd.s32 %s45, 1
      %s47 = scalar_select %p44, %s45, %s46
      %p50 = pneg %p44
      %p51 = scmp.eq.s32.totalorder %s23, 1
      %p52 = por %p50, %p51
      %p53 = scmp.ne.s32.totalorder %s45, %s48
      %p54 = scmp.eq.s32.totalorder %s23, 0
      %p55 = por %p53, %p54
      %p56 = scmp.ne.s32.totalorder %s45, %s48
      %p57 = scmp.eq.s32.totalorder %s28, 1
      %p58 = por %p56, %p57
      %p59 = scmp.ne.s32.totalorder %s48, %s49
      %p60 = scmp.eq.s32.totalorder %s28, 0
      %p61 = por %p59, %p60
      %p62 = scmp.ne.s32.totalorder %s48, %s49
      %p63 = scmp.eq.s32.totalorder %s29, 1
      %p64 = por %p62, %p63
      %p66 = scmp.ne.s32.totalorder %s49, %s65
      %p67 = scmp.eq.s32.totalorder %s29, 0
      %p68 = por %p66, %p67
      %s69 = ssub.s32 %s30, %s42
      %s70 = ssub.s32 %s31, %s38
      %s71 = sor.u32 %s69, %s70
      %p72 = scmp.eq.s32.totalorder %s71, 0
      %s74 = sadd.s32 %s73, 1
      %s75 = scalar_select %p72, %s73, %s74
      %p78 = pneg %p72
      %p79 = scmp.eq.s32.totalorder %s23, 1
      %p80 = por %p78, %p79
      %p81 = scmp.ne.s32.totalorder %s73, %s76
      %p82 = scmp.eq.s32.totalorder %s23, 0
      %p83 = por %p81, %p82
      %p84 = scmp.ne.s32.totalorder %s73, %s76
      %p85 = scmp.eq.s32.totalorder %s28, 1
      %p86 = por %p84, %p85
      %p87 = scmp.ne.s32.totalorder %s76, %s77
      %p88 = scmp.eq.s32.totalorder %s28, 0
      %p89 = por %p87, %p88
      %p90 = scmp.ne.s32.totalorder %s76, %s77
      %p91 = scmp.eq.s32.totalorder %s29, 1
      %p92 = por %p90, %p91
      %p94 = scmp.ne.s32.totalorder %s77, %s93
      %p95 = scmp.eq.s32.totalorder %s29, 0
      %p96 = por %p94, %p95
      %s98 = sadd.s32 %s97, 1
      %p101 = scmp.eq.s32.totalorder %s23, 1
      %p102 = scmp.ne.s32.totalorder %s97, %s99
      %p103 = scmp.eq.s32.totalorder %s23, 0
      %p104 = por %p102, %p103
      %p105 = scmp.ne.s32.totalorder %s97, %s99
      %p106 = scmp.eq.s32.totalorder %s28, 1
      %p107 = por %p105, %p106
      %p108 = scmp.ne.s32.totalorder %s99, %s100
      %p109 = scmp.eq.s32.totalorder %s28, 0
      %p110 = por %p108, %p109
      %p111 = scmp.ne.s32.totalorder %s99, %s100
      %p112 = scmp.eq.s32.totalorder %s29, 1
      %p113 = por %p111, %p112
      %p115 = scmp.ne.s32.totalorder %s100, %s114
      %p116 = scmp.eq.s32.totalorder %s29, 0
      %p117 = por %p115, %p116
      %s119 = sadd.s32 %s118, 1
      %p122 = scmp.eq.s32.totalorder %s23, 1
      %p123 = scmp.ne.s32.totalorder %s118, %s120
      %p124 = scmp.eq.s32.totalorder %s23, 0
      %p125 = por %p123, %p124
      %p126 = scmp.ne.s32.totalorder %s118, %s120
      %p127 = scmp.eq.s32.totalorder %s28, 1
      %p128 = por %p126, %p127
      %p129 = scmp.ne.s32.totalorder %s120, %s121
      %p130 = scmp.eq.s32.totalorder %s28, 0
      %p131 = por %p129, %p130
      %p132 = scmp.ne.s32.totalorder %s120, %s121
      %p133 = scmp.eq.s32.totalorder %s29, 1
      %p134 = por %p132, %p133
      %p136 = scmp.ne.s32.totalorder %s121, %s135
      %p137 = scmp.eq.s32.totalorder %s29, 0
      %p138 = por %p136, %p137
      %s140 = sadd.s32 %s139, 1
      %p143 = scmp.eq.s32.totalorder %s23, 1
      %p144 = scmp.ne.s32.totalorder %s139, %s141
      %p145 = scmp.eq.s32.totalorder %s23, 0
      %p146 = por %p144, %p145
      %p147 = scmp.ne.s32.totalorder %s139, %s141
      %p148 = scmp.eq.s32.totalorder %s28, 1
      %p149 = por %p147, %p148
      %p150 = scmp.ne.s32.totalorder %s141, %s142
      %p151 = scmp.eq.s32.totalorder %s28, 0
      %p152 = por %p150, %p151
      %p153 = scmp.ne.s32.totalorder %s141, %s142
      %p154 = scmp.eq.s32.totalorder %s29, 1
      %p155 = por %p153, %p154
      %p157 = scmp.ne.s32.totalorder %s142, %s156
      %p158 = scmp.eq.s32.totalorder %s29, 0
      %p159 = por %p157, %p158
      %s161 = sadd.s32 %s160, 1
      %p164 = scmp.eq.s32.totalorder %s23, 1
      %p165 = scmp.ne.s32.totalorder %s160, %s162
      %p166 = scmp.eq.s32.totalorder %s23, 0
      %p167 = por %p165, %p166
      %p168 = scmp.ne.s32.totalorder %s160, %s162
      %p169 = scmp.eq.s32.totalorder %s28, 1
      %p170 = por %p168, %p169
      %p171 = scmp.ne.s32.totalorder %s162, %s163
      %p172 = scmp.eq.s32.totalorder %s28, 0
      %p173 = por %p171, %p172
      %p174 = scmp.ne.s32.totalorder %s162, %s163
      %p175 = scmp.eq.s32.totalorder %s29, 1
      %p176 = por %p174, %p175
      %p178 = scmp.ne.s32.totalorder %s163, %s177
      %p179 = scmp.eq.s32.totalorder %s29, 0
      %p180 = por %p178, %p179
      %s182 = sadd.s32 %s181, 1
      %p185 = scmp.eq.s32.totalorder %s23, 1
      %p186 = scmp.ne.s32.totalorder %s181, %s183
      %p187 = scmp.eq.s32.totalorder %s23, 0
      %p188 = por %p186, %p187
      %p189 = scmp.ne.s32.totalorder %s181, %s183
      %p190 = scmp.eq.s32.totalorder %s28, 1
      %p191 = por %p189, %p190
      %p192 = scmp.ne.s32.totalorder %s183, %s184
      %p193 = scmp.eq.s32.totalorder %s28, 0
      %p194 = por %p192, %p193
      %p195 = scmp.ne.s32.totalorder %s183, %s184
      %p196 = scmp.eq.s32.totalorder %s29, 1
      %p197 = por %p195, %p196
      %p199 = scmp.ne.s32.totalorder %s184, %s198
      %p200 = scmp.eq.s32.totalorder %s29, 0
      %p201 = por %p199, %p200
      %s203 = sadd.s32 %s202, 1
      %p206 = scmp.eq.s32.totalorder %s23, 1
      %p207 = scmp.ne.s32.totalorder %s202, %s204
      %p208 = scmp.eq.s32.totalorder %s23, 0
      %p209 = por %p207, %p208
      %p210 = scmp.ne.s32.totalorder %s202, %s204
      %p211 = scmp.eq.s32.totalorder %s28, 1
      %p212 = por %p210, %p211
      %p213 = scmp.ne.s32.totalorder %s204, %s205
      %p214 = scmp.eq.s32.totalorder %s28, 0
      %p215 = por %p213, %p214
      %p216 = scmp.ne.s32.totalorder %s204, %s205
      %p217 = scmp.eq.s32.totalorder %s29, 1
      %p218 = por %p216, %p217
      %p220 = scmp.ne.s32.totalorder %s205, %s219
      %p221 = scmp.eq.s32.totalorder %s29, 0
      %p222 = por %p220, %p221
      %s224 = sadd.s32 %s223, 1
      %p227 = scmp.eq.s32.totalorder %s23, 1
      %p228 = scmp.ne.s32.totalorder %s223, %s225
      %p229 = scmp.eq.s32.totalorder %s23, 0
      %p230 = por %p228, %p229
      %p231 = scmp.ne.s32.totalorder %s223, %s225
      %p232 = scmp.eq.s32.totalorder %s28, 1
      %p233 = por %p231, %p232
      %p234 = scmp.ne.s32.totalorder %s225, %s226
      %p235 = scmp.eq.s32.totalorder %s28, 0
      %p236 = por %p234, %p235
      %p237 = scmp.ne.s32.totalorder %s225, %s226
      %p238 = scmp.eq.s32.totalorder %s29, 1
      %p239 = por %p237, %p238
      %p241 = scmp.ne.s32.totalorder %s226, %s240
      %p242 = scmp.eq.s32.totalorder %s29, 0
      %p243 = por %p241, %p242
      %s245 = sadd.s32 %s244, 1
      %p248 = scmp.eq.s32.totalorder %s23, 1
      %p249 = scmp.ne.s32.totalorder %s244, %s246
      %p250 = scmp.eq.s32.totalorder %s23, 0
      %p251 = por %p249, %p250
      %p252 = scmp.ne.s32.totalorder %s244, %s246
      %p253 = scmp.eq.s32.totalorder %s28, 1
      %p254 = por %p252, %p253
      %p255 = scmp.ne.s32.totalorder %s246, %s247
      %p256 = scmp.eq.s32.totalorder %s28, 0
      %p257 = por %p255, %p256
      %p258 = scmp.ne.s32.totalorder %s246, %s247
      %p259 = scmp.eq.s32.totalorder %s29, 1
      %p260 = por %p258, %p259
      %p262 = scmp.ne.s32.totalorder %s247, %s261
      %p263 = scmp.eq.s32.totalorder %s29, 0
      %p264 = por %p262, %p263
      %s266 = sadd.s32 %s265, 1
      %p269 = scmp.eq.s32.totalorder %s23, 1
      %p270 = scmp.ne.s32.totalorder %s265, %s267
      %p271 = scmp.eq.s32.totalorder %s23, 0
      %p272 = por %p270, %p271
      %p273 = scmp.ne.s32.totalorder %s265, %s267
      %p274 = scmp.eq.s32.totalorder %s28, 1
      %p275 = por %p273, %p274
      %p276 = scmp.ne.s32.totalorder %s267, %s268
      %p277 = scmp.eq.s32.totalorder %s28, 0
      %p278 = por %p276, %p277
      %p279 = scmp.ne.s32.totalorder %s267, %s268
      %p280 = scmp.eq.s32.totalorder %s29, 1
      %p281 = por %p279, %p280
      %p283 = scmp.ne.s32.totalorder %s268, %s282
      %p284 = scmp.eq.s32.totalorder %s29, 0
      %p285 = por %p283, %p284
      %s286 = ssub.s32 %s30, %s42
      %p287 = scmp.eq.s32.totalorder %s286, 0
      %s289 = sadd.s32 %s288, 1
      %s290 = scalar_select %p287, %s288, %s289
      %p293 = pneg %p287
      %p294 = scmp.eq.s32.totalorder %s23, 1
      %p295 = por %p293, %p294
      %p296 = scmp.ne.s32.totalorder %s288, %s291
      %p297 = scmp.eq.s32.totalorder %s23, 0
      %p298 = por %p296, %p297
      %p299 = scmp.ne.s32.totalorder %s288, %s291
      %p300 = scmp.eq.s32.totalorder %s28, 1
      %p301 = por %p299, %p300
      %p302 = scmp.ne.s32.totalorder %s291, %s292
      %p303 = scmp.eq.s32.totalorder %s28, 0
      %p304 = por %p302, %p303
      %p305 = scmp.ne.s32.totalorder %s291, %s292
      %p306 = scmp.eq.s32.totalorder %s29, 1
      %p307 = por %p305, %p306
      %p309 = scmp.ne.s32.totalorder %s292, %s308
      %p310 = scmp.eq.s32.totalorder %s29, 0
      %p311 = por %p309, %p310
      %p312 = scmp.le.s32.totalorder 1, %s23
      %p313 = scmp.lt.s32.totalorder %s23, 3
      %p314 = pnand %p312, %p313
      %p315 = pneg %p314
      // Predicated region
      $region9: #{tpu_custom_call.1} parent=5 // pred_check
        _
      $region10: #{tpu_custom_call.1} parent=5 // pred_check_branch
        %317 = sbr.rel (%p314) target = $region12
      $region11: #{tpu_custom_call.1} parent=5 // pred_region
        %s318 = ssub.s32 %s23, 1
        // Predicated region
        $region13: #{tpu_custom_call.1} parent=11 // pred_check
          %p319 = pneg %p110
        $region14: #{tpu_custom_call.1} parent=11 // pred_check_branch
          %321 = sbr.rel (%p319) target = $region16
        $region15: #{tpu_custom_call.1} parent=11 // pred_region
          _
        $region16: #{tpu_custom_call.1} parent=11 // pred_fallthru
          _
        // Predicated region
        $region17: #{tpu_custom_call.1} parent=11 // pred_check
          %p322 = pneg %p131
        $region18: #{tpu_custom_call.1} parent=11 // pred_check_branch
          %324 = sbr.rel (%p322) target = $region20
        $region19: #{tpu_custom_call.1} parent=11 // pred_region
          %326 = vsyncadd [#allocation9], 0
          %s328 = sshll.u32 %s3, 4
          %s329 = int_to_ptr.hbm [resolvable:$true] %s328
          %s330 = sshll.u32 [#allocation8], 4
          %s331 = int_to_ptr.vmem [resolvable:$true] %s330
          %333 = dma.hbm_to_vmem [thread:$0]  %s329, 16, %s331, [#allocation9]
        $region20: #{tpu_custom_call.1} parent=11 // pred_fallthru
          _
        // Predicated region
        $region21: #{tpu_custom_call.1} parent=11 // pred_check
          %p334 = pneg %p152
        $region22: #{tpu_custom_call.1} parent=11 // pred_check_branch
          %336 = sbr.rel (%p334) target = $region24
        $region23: #{tpu_custom_call.1} parent=11 // pred_region
          %338 = vsyncadd [#allocation9], 0
          %s339 = sshll.u32 %s4, 4
          %s340 = int_to_ptr.hbm [resolvable:$true] %s339
          %s341 = sshll.u32 [#allocation10], 4
          %s342 = int_to_ptr.vmem [resolvable:$true] %s341
          %347 = dma.hbm_to_vmem [thread:$0]  %s340, 256, %s342, [#allocation9], 64, 64, 4
        $region24: #{tpu_custom_call.1} parent=11 // pred_fallthru
          _
        // Predicated region
        $region25: #{tpu_custom_call.1} parent=11 // pred_check
          %p348 = pneg %p173
        $region26: #{tpu_custom_call.1} parent=11 // pred_check_branch
          %350 = sbr.rel (%p348) target = $region28
        $region27: #{tpu_custom_call.1} parent=11 // pred_region
          _
        $region28: #{tpu_custom_call.1} parent=11 // pred_fallthru
          _
        // Predicated region
        $region29: #{tpu_custom_call.1} parent=11 // pred_check
          %p351 = pneg %p194
        $region30: #{tpu_custom_call.1} parent=11 // pred_check_branch
          %353 = sbr.rel (%p351) target = $region32
        $region31: #{tpu_custom_call.1} parent=11 // pred_region
          %355 = vsyncadd [#allocation12], 0
          %s356 = sshll.u32 %s6, 4
          %s357 = int_to_ptr.hbm [resolvable:$true] %s356
          %s358 = sshll.u32 [#allocation11], 4
          %s359 = int_to_ptr.vmem [resolvable:$true] %s358
          %364 = dma.hbm_to_vmem [thread:$0]  %s357, 256, %s359, [#allocation12], 64, 64, 4
        $region32: #{tpu_custom_call.1} parent=11 // pred_fallthru
          _
        // Predicated region
        $region33: #{tpu_custom_call.1} parent=11 // pred_check
          %p365 = pneg %p215
        $region34: #{tpu_custom_call.1} parent=11 // pred_check_branch
          %367 = sbr.rel (%p365) target = $region36
        $region35: #{tpu_custom_call.1} parent=11 // pred_region
          _
        $region36: #{tpu_custom_call.1} parent=11 // pred_fallthru
          _
        // Predicated region
        $region37: #{tpu_custom_call.1} parent=11 // pred_check
          %p368 = pneg %p236
        $region38: #{tpu_custom_call.1} parent=11 // pred_check_branch
          %370 = sbr.rel (%p368) target = $region40
        $region39: #{tpu_custom_call.1} parent=11 // pred_region
          %372 = vsyncadd [#allocation12], 0
          %s373 = sshll.u32 %s8, 4
          %s374 = int_to_ptr.hbm [resolvable:$true] %s373
          %s375 = sshll.u32 [#allocation13], 4
          %s376 = int_to_ptr.vmem [resolvable:$true] %s375
          %381 = dma.hbm_to_vmem [thread:$0]  %s374, 256, %s376, [#allocation12], 64, 64, 4
        $region40: #{tpu_custom_call.1} parent=11 // pred_fallthru
          _
        // Predicated region
        $region41: #{tpu_custom_call.1} parent=11 // pred_check
          %p382 = pneg %p257
        $region42: #{tpu_custom_call.1} parent=11 // pred_check_branch
          %384 = sbr.rel (%p382) target = $region44
        $region43: #{tpu_custom_call.1} parent=11 // pred_region
          %386 = vsyncadd [#allocation15], 0
          %s387 = sshll.u32 %s9, 4
          %s388 = int_to_ptr.hbm [resolvable:$true] %s387
          %s389 = sshll.u32 [#allocation14], 4
          %s390 = int_to_ptr.vmem [resolvable:$true] %s389
          %395 = dma.hbm_to_vmem [thread:$0]  %s388, 256, %s390, [#allocation15], 64, 64, 4
        $region44: #{tpu_custom_call.1} parent=11 // pred_fallthru
          _
        // Predicated region
        $region45: #{tpu_custom_call.1} parent=11 // pred_check
          %p396 = pneg %p278
        $region46: #{tpu_custom_call.1} parent=11 // pred_check_branch
          %398 = sbr.rel (%p396) target = $region48
        $region47: #{tpu_custom_call.1} parent=11 // pred_region
          _
        $region48: #{tpu_custom_call.1} parent=11 // pred_fallthru
          _
      $region12: #{tpu_custom_call.1} parent=5 // pred_fallthru
        _
      %p399 = scmp.lt.s32.totalorder %s23, 2
      // Predicated region
      $region49: #{tpu_custom_call.1} parent=5 // pred_check
        %p400 = pneg %p399
      $region50: #{tpu_custom_call.1} parent=5 // pred_check_branch
        %402 = sbr.rel (%p400) target = $region52
      $region51: #{tpu_custom_call.1} parent=5 // pred_region
        // Predicated region
        $region53: #{tpu_custom_call.1} parent=51 // pred_check
          %p403 = pneg %p55
        $region54: #{tpu_custom_call.1} parent=51 // pred_check_branch
          %405 = sbr.rel (%p403) target = $region56
        $region55: #{tpu_custom_call.1} parent=51 // pred_region
          %s406 = sand.u32 %s45, 1
          %s407 = scalar_lea.sflag [#allocation7], %s406
          %s408 = sand.u32 %s45, 1
          %s409 = smul.addr %s408, 4
          %s410 = scalar_lea.vmem [#allocation6], %s409
          %412 = vsyncadd %s407, 0
          %s413 = smul.addr %s30, 4
          %s414 = scalar_lea.hbm %s0, %s413
          %s416 = sshll.u32 %s414, 4
          %s417 = int_to_ptr.hbm [resolvable:$true] %s416
          %s418 = sshll.u32 %s410, 4
          %s419 = int_to_ptr.vmem [resolvable:$true] %s418
          %421 = dma.hbm_to_vmem [thread:$0]  %s417, 64, %s419, %s407
        $region56: #{tpu_custom_call.1} parent=51 // pred_fallthru
          _
        // Predicated region
        $region57: #{tpu_custom_call.1} parent=51 // pred_check
          %p422 = pneg %p83
        $region58: #{tpu_custom_call.1} parent=51 // pred_check_branch
          %424 = sbr.rel (%p422) target = $region60
        $region59: #{tpu_custom_call.1} parent=51 // pred_region
          %s425 = smul.u32 2, %s31
          %p426 = scmp.lt.s32.totalorder %s30, 1
          %s427 = scalar_select %p426, %s30, 1
          %p428 = scmp.lt.s32.totalorder %s425, 1
          %s429 = scalar_select %p428, %s425, 1
          %s430 = smul.addr %s427, 2
          %s431 = sadd.s32 %s429, %s430
          %s432 = smul.addr %s431, 8
          %s433 = scalar_lea.vmem %s1, %s432
          %s434 = smul.u32 2, %s31
        $region60: #{tpu_custom_call.1} parent=51 // pred_fallthru
          _
      $region52: #{tpu_custom_call.1} parent=5 // pred_fallthru
        _
      %p435 = scmp.le.s32.totalorder 1, %s23
      %p436 = scmp.lt.s32.totalorder %s23, 3
      %p437 = pnand %p435, %p436
      %p438 = pneg %p437
      // Predicated region
      $region61: #{tpu_custom_call.1} parent=5 // pred_check
        _
      $region62: #{tpu_custom_call.1} parent=5 // pred_check_branch
        %440 = sbr.rel (%p437) target = $region64
      $region63: #{tpu_custom_call.1} parent=5 // pred_region
        %s441 = ssub.s32 %s23, 1
        %s442 = sand.u32 %s48, 1
        %s443 = scalar_lea.sflag [#allocation7], %s442
        %s444 = sand.u32 %s48, 1
        %s445 = smul.addr %s444, 4
        %s446 = scalar_lea.vmem [#allocation6], %s445
        // Predicated region
        $region65: #{tpu_custom_call.1} parent=63 // pred_check
          %p447 = pneg %p61
        $region66: #{tpu_custom_call.1} parent=63 // pred_check_branch
          %449 = sbr.rel (%p447) target = $region68
        $region67: #{tpu_custom_call.1} parent=63 // pred_region
          %451 = dma.done %s443, 64
        $region68: #{tpu_custom_call.1} parent=63 // pred_fallthru
          _
        // Predicated region
        $region69: #{tpu_custom_call.1} parent=63 // pred_check
          %p452 = pneg %p131
        $region70: #{tpu_custom_call.1} parent=63 // pred_check_branch
          %454 = sbr.rel (%p452) target = $region72
        $region71: #{tpu_custom_call.1} parent=63 // pred_region
          %456 = dma.done [#allocation9], 16
        $region72: #{tpu_custom_call.1} parent=63 // pred_fallthru
          _
        // Predicated region
        $region73: #{tpu_custom_call.1} parent=63 // pred_check
          %p457 = pneg %p152
        $region74: #{tpu_custom_call.1} parent=63 // pred_check_branch
          %459 = sbr.rel (%p457) target = $region76
        $region75: #{tpu_custom_call.1} parent=63 // pred_region
          %461 = dma.done [#allocation9], 256
        $region76: #{tpu_custom_call.1} parent=63 // pred_fallthru
          _
        // Predicated region
        $region77: #{tpu_custom_call.1} parent=63 // pred_check
          %p462 = pneg %p194
        $region78: #{tpu_custom_call.1} parent=63 // pred_check_branch
          %464 = sbr.rel (%p462) target = $region80
        $region79: #{tpu_custom_call.1} parent=63 // pred_region
          %466 = dma.done [#allocation12], 256
        $region80: #{tpu_custom_call.1} parent=63 // pred_fallthru
          _
        // Predicated region
        $region81: #{tpu_custom_call.1} parent=63 // pred_check
          %p467 = pneg %p236
        $region82: #{tpu_custom_call.1} parent=63 // pred_check_branch
          %469 = sbr.rel (%p467) target = $region84
        $region83: #{tpu_custom_call.1} parent=63 // pred_region
          %471 = dma.done [#allocation12], 256
        $region84: #{tpu_custom_call.1} parent=63 // pred_fallthru
          _
        // Predicated region
        $region85: #{tpu_custom_call.1} parent=63 // pred_check
          %p472 = pneg %p257
        $region86: #{tpu_custom_call.1} parent=63 // pred_check_branch
          %474 = sbr.rel (%p472) target = $region88
        $region87: #{tpu_custom_call.1} parent=63 // pred_region
          %476 = dma.done [#allocation15], 256
        $region88: #{tpu_custom_call.1} parent=63 // pred_fallthru
          _
        %s477 = sand.u32 %s48, 1
        %s478 = scalar_lea.sflag [#allocation7], %s477
        %s479 = sand.u32 %s48, 1
        %s480 = smul.addr %s479, 4
        %s481 = scalar_lea.vmem [#allocation6], %s480
        %p482 = pneg %p61
        %p483 = pneg %p58
        %s484 = smul.u32 2, %s33
        %p485 = scmp.lt.s32.totalorder %s32, 1
        %s486 = scalar_select %p485, %s32, 1
        %p487 = scmp.lt.s32.totalorder %s484, 1
        %s488 = scalar_select %p487, %s484, 1
        %s489 = smul.addr %s486, 2
        %s490 = sadd.s32 %s488, %s489
        %s491 = smul.addr %s490, 8
        %s492 = scalar_lea.vmem %s1, %s491
        %p493 = pneg %p89
        %p494 = pneg %p86
        %p495 = pneg %p110
        %p496 = pneg %p107
        %p497 = pneg %p131
        %p498 = pneg %p128
        %p499 = pneg %p152
        %p500 = pneg %p149
        %p501 = pneg %p173
        %p502 = pneg %p170
        %p503 = pneg %p194
        %p504 = pneg %p191
        %p505 = pneg %p215
        %p506 = pneg %p212
        %p507 = pneg %p236
        %p508 = pneg %p233
        %p509 = pneg %p257
        %p510 = pneg %p254
        %p511 = pneg %p278
        %p512 = pneg %p275
        %p513 = pneg %p304
        %p514 = pneg %p301
        %p515 = scmp.lt.s32.totalorder %s32, 1
        %s516 = scalar_select %p515, %s32, 1
        %s517 = smul.addr %s516, 4
        %s518 = smul.addr %s517, 8
        %s519 = scalar_lea.vmem %s11, %s518
        %s520 = smul.u32 2, %s33
        %p521 = scmp.lt.s32.totalorder %s32, 1
        %s522 = scalar_select %p521, %s32, 1
        %p523 = scmp.lt.s32.totalorder %s520, 1
        %s524 = scalar_select %p523, %s520, 1
        %s525 = smul.addr %s522, 2
        %s526 = sadd.s32 %s524, %s525
        %s527 = smul.addr %s526, 8
        %s528 = scalar_lea.vmem %s1, %s527
        %s529 = smul.u32 2, %s33
        %p530 = scmp.lt.s32.totalorder %s32, 1
        %s531 = scalar_select %p530, %s32, 1
        %s532 = smul.addr %s531, 4
        %s533 = smul.addr %s532, 8
        %s534 = scalar_lea.vmem %s11, %s533
        %p536 = scmp.eq.s32.totalorder %s33, 0
        // Predicated region
        $region89: #{tpu_custom_call.1} parent=63 // pred_check
          %p537 = pneg %p536
        $region90: #{tpu_custom_call.1} parent=63 // pred_check_branch
          %539 = sbr.rel (%p537) target = $region92
        $region91: #{tpu_custom_call.1} parent=63 // pred_region
          %v540 = vld [vmem:[%s446] sm:$0xf]
          %v541 = vpack.c.bf16 %v540, %v540
          %v542 = vld [vmem:[%s2] sm:$0x3]
          %v543 = vld [vmem:[#allocation8] sm:$0x1]
          %v545 = vperm.slane %v543, 0
          %547 = vxpose.xlu0.c.b16.start [1/8] %v541, 128
          %548 = vxpose.xlu0.c.b16.cont [2/8] 0, 128
          %549 = vxpose.xlu0.c.b16.cont [3/8] 0, 128
          %550 = vxpose.xlu0.c.b16.cont [4/8] 0, 128
          %551 = vxpose.xlu0.c.b16.cont [5/8] 0, 128
          %552 = vxpose.xlu0.c.b16.cont [6/8] 0, 128
          %553 = vxpose.xlu0.c.b16.cont [7/8] 0, 128
          %554 = vxpose.xlu0.c.b16.end [8/8] 0, 128
          %v555 = vpop.trf.xlu0
          %v556 = vpop.trf.xlu0
          %v557 = vpop.trf.xlu0
          %v558 = vpop.trf.xlu0
          %v559 = vpop.trf.xlu0
          %v560 = vpop.trf.xlu0
          %v561 = vpop.trf.xlu0
          %v562 = vpop.trf.xlu0
          %vm563 = vcmask 31744
          %v565 = vsel %vm563, %v555, 0
          %vm567 = vcmask 1041408
          %v569 = vsel %vm567, %v542, 0
          %571 = vmatpush.bf16.msra.mxu0 0
          %572 = vmatpush.bf16.msra.mxu0 0
          %573 = vmatpush.bf16.msra.mxu0 0
          %574 = vmatpush.bf16.msra.mxu0 0
          %575 = vmatpush.bf16.msra.mxu0 0
          %576 = vmatpush.bf16.msra.mxu0 0
          %577 = vmatpush.bf16.msra.mxu0 0
          %578 = vmatpush.bf16.msra.mxu0 %v569
          %579 = vmatmul.bf16.gmra.mxu0 %v565
          %v580 = vpop.f32.mrf.mxu0
          %v581 = vadd.f32 %v545, %v580
          %v582 = vpop.f32.mrf.mxu0
          %v583 = vadd.f32 %v545, %v582
          %584 = vdwg.mxu0
          %v585 = vmax.f32 %v581, 0.0
          %v586 = vmax.f32 %v583, 0.0
          %vm587 = vcmask 261120
          %588 = vst.msk [vmem:[#allocation2] sm:$0xff] %vm587, %v585
          %589 = vst.msk [vmem:[#allocation2 + $0x8] sm:$0xff] %vm587, %v586
          %v590 = vpack.c.bf16 %v586, %v585
          %v591 = vld [vmem:[#allocation10] sm:$0xf]
          %v592 = vld [vmem:[#allocation10 + $0x4] sm:$0xf]
          %v593 = vld [vmem:[#allocation10 + $0x8] sm:$0xf]
          %v594 = vld [vmem:[#allocation10 + $0xc] sm:$0xf]
          %v599 = vunpack.c.l.b16 %v591
          %v600 = vunpack.c.l.b16 %v592
          %v601 = vunpack.c.l.b16 %v593
          %v602 = vunpack.c.l.b16 %v594
          %v603 = vpack.c.b16 %v600, %v599
          %v604 = vpack.c.b16 %v602, %v601
          %v608 = vsel %vm587, %v590, 0
          %610 = vmatpush.bf16.msra.mxu0 0
          %611 = vmatpush.bf16.msra.mxu0 0
          %612 = vmatpush.bf16.msra.mxu0 0
          %613 = vmatpush.bf16.msra.mxu0 0
          %614 = vmatpush.bf16.msra.mxu0 0
          %615 = vmatpush.bf16.msra.mxu0 0
          %616 = vmatpush.bf16.msra.mxu0 %v604
          %617 = vmatpush.bf16.msra.mxu0 %v603
          %618 = vmatmul.bf16.gmra.mxu0 %v608
          %v619 = vpop.f32.mrf.mxu0
          %v620 = vadd.f32 0.0, %v619
          %v621 = vpop.f32.mrf.mxu0
          %v622 = vadd.f32 0.0, %v621
          %623 = vdwg.mxu0
          %v624 = vld [vmem:[%s5] sm:$0x1]
          %v626 = vperm.slane %v624, 0
          %v628 = vadd.f32 %v620, %v626
          %v629 = vadd.f32 %v622, %v626
          %630 = vst.msk [vmem:[#allocation4] sm:$0xff] %vm587, %v628
          %631 = vst.msk [vmem:[#allocation4 + $0x8] sm:$0xff] %vm587, %v629
          %vm632 = vcmask 269568
          %633 = vst.msk [vmem:[#allocation4] sm:$0xff] %vm632, 1.0
          %634 = vst.msk [vmem:[#allocation4 + $0x8] sm:$0xff] %vm632, 1.0
          %v635 = vpack.c.bf16 %v620, %v620
          %v636 = vpack.c.bf16 %v622, %v622
          %639 = vrot.lane.b32.xlu0 %v635, 96
          %v640 = vpop.permute.xlu0 %639
          %641 = vrot.lane.b32.xlu0 %v636, 96
          %v642 = vpop.permute.xlu0 %641
          %vm645 = vcmask 60416
          %646 = vst.msk [vmem:[#allocation3] sm:$0xf] %vm645, %v640
          %647 = vst.msk [vmem:[#allocation3 + $0x4] sm:$0xf] %vm645, %v642
          %vm648 = vcmask 269312
          %649 = vst.msk [vmem:[#allocation5] sm:$0xff] %vm648, 0.0
          %650 = vst.msk [vmem:[#allocation5 + $0x8] sm:$0xff] %vm648, 0.0
        $region92: #{tpu_custom_call.1} parent=63 // pred_fallthru
          _
        %s651 = smul.u32 %s33, 16
        %s652 = sshra.s32 %s651, 3
        %s653 = sand.u32 %s651, 7
        %s654 = smul.addr %s652, 4
        %s655 = scalar_lea.vmem [#allocation3], %s654
        %v656 = vld [vmem:[%s655] sm:$0xf]
        %v657 = vld [vmem:[%s655 + $0x4] sm:$0xf]
        %v658 = vld [vmem:[#allocation3] sm:$0xf]
        %v659 = vld [vmem:[#allocation3 + $0x4] sm:$0xf]
        %v660 = vld [vmem:[%s528] sm:$0xff]
        %v661 = vld [vmem:[%s528 + $0x8] sm:$0xff]
        %v664 = vunpack.c.l.b16 %v656
        %v665 = vunpack.c.l.b16 %v657
        %v666 = vpack.c.b16 %v665, %v664
        %v669 = vunpack.c.l.b16 %v658
        %v670 = vunpack.c.l.b16 %v659
        %v671 = vpack.c.b16 %v670, %v669
        %vm672 = vcmask 64512
        %v674 = vsel %vm672, %v666, 0
        %v677 = vsel %vm672, %v671, 0
        %679 = vmatpush.bf16.xpose.msra.mxu0 0
        %680 = vmatpush.bf16.xpose.msra.mxu0 0
        %681 = vmatpush.bf16.xpose.msra.mxu0 0
        %682 = vmatpush.bf16.xpose.msra.mxu0 0
        %683 = vmatpush.bf16.xpose.msra.mxu0 0
        %684 = vmatpush.bf16.xpose.msra.mxu0 0
        %685 = vmatpush.bf16.xpose.msra.mxu0 0
        %686 = vmatpush.bf16.xpose.msra.mxu0 %v677
        %687 = vmatmul.bf16.gmra.mxu0 %v674
        %v688 = vpop.f32.mrf.mxu0
        %v689 = vadd.f32 %v660, %v688
        %v690 = vpop.f32.mrf.mxu0
        %v691 = vadd.f32 %v661, %v690
        %692 = vdwg.mxu0
        %vm693 = vcmask 130048
        %v694 = vsel %vm693, %v689, -inf
        %695 = vmax.xlane.f32.xlu0 %v694
        %v696 = vpop.xlane.xlu0 %695
        %v697 = vsel %vm693, %v691, -inf
        %698 = vmax.xlane.f32.xlu0 %v697
        %v699 = vpop.xlane.xlu0 %698
        %v700 = vsub.f32 %v689, %v696
        %v701 = vsub.f32 %v691, %v699
        %v702 = vmul.f32 %v700, 1.442695
        %v703 = vpow.pop %v702
        %v704 = vmul.f32 %v701, 1.442695
        %v705 = vpow.pop %v704
        %v706 = vsel %vm693, %v703, 0.0
        %707 = vadd.xlane.f32.xlu0 %v706
        %v708 = vpop.xlane.xlu0 %707
        %v709 = vsel %vm693, %v705, 0.0
        %710 = vadd.xlane.f32.xlu0 %v709
        %v711 = vpop.xlane.xlu0 %710
        %v712 = vrcp.pop %v708
        %v713 = vrcp.pop %v711
        %s714 = scalar_lea.vmem [#allocation4], %s651
        %v715 = vld [vmem:[%s714] sm:$0xff]
        %v716 = vld [vmem:[%s714 + $0x8] sm:$0xff]
        %v717 = vmul.f32 %v715, %v712
        %v718 = vmul.f32 %v716, %v713
        %v719 = vpack.c.bf16 %v718, %v717
        %v720 = vld [vmem:[#allocation5] sm:$0xff]
        %v721 = vld [vmem:[#allocation5 + $0x8] sm:$0xff]
        %v722 = vpack.c.bf16 %v705, %v703
        %723 = vxpose.xlu0.c.b16.start [1/8] %v722, 128
        %724 = vxpose.xlu0.c.b16.cont [2/8] 0, 128
        %725 = vxpose.xlu0.c.b16.cont [3/8] 0, 128
        %726 = vxpose.xlu0.c.b16.cont [4/8] 0, 128
        %727 = vxpose.xlu0.c.b16.cont [5/8] 0, 128
        %728 = vxpose.xlu0.c.b16.cont [6/8] 0, 128
        %729 = vxpose.xlu0.c.b16.cont [7/8] 0, 128
        %730 = vxpose.xlu0.c.b16.end [8/8] 0, 128
        %v731 = vpop.trf.xlu0
        %v732 = vpop.trf.xlu0
        %v733 = vpop.trf.xlu0
        %v734 = vpop.trf.xlu0
        %v735 = vpop.trf.xlu0
        %v736 = vpop.trf.xlu0
        %v737 = vpop.trf.xlu0
        %v738 = vpop.trf.xlu0
        %v740 = vsel %vm693, %v731, 0
        %742 = vmatpush.bf16.msra.mxu0 0
        %743 = vmatpush.bf16.msra.mxu0 0
        %744 = vmatpush.bf16.msra.mxu0 0
        %745 = vmatpush.bf16.msra.mxu0 0
        %746 = vmatpush.bf16.msra.mxu0 0
        %747 = vmatpush.bf16.msra.mxu0 0
        %748 = vmatpush.bf16.msra.mxu0 0
        %749 = vmatpush.bf16.msra.mxu0 %v719
        %750 = vmatmul.bf16.gmra.mxu0 %v740
        %v751 = vpop.f32.mrf.mxu0
        %v752 = vadd.f32 0.0, %v751
        %v753 = vpop.f32.mrf.mxu0
        %v754 = vadd.f32 0.0, %v753
        %755 = vdwg.mxu0
        %v756 = vadd.f32 %v720, %v752
        %v757 = vadd.f32 %v721, %v754
        %vm758 = vcmask 269312
        %759 = vst.msk [vmem:[#allocation5] sm:$0xff] %vm758, %v756
        %760 = vst.msk [vmem:[#allocation5 + $0x8] sm:$0xff] %vm758, %v757
        // Predicated region
        $region93: #{tpu_custom_call.1} parent=63 // pred_check
          %p761 = pneg %p536
        $region94: #{tpu_custom_call.1} parent=63 // pred_check_branch
          %763 = sbr.rel (%p761) target = $region96
        $region95: #{tpu_custom_call.1} parent=63 // pred_region
          %v764 = vld [vmem:[#allocation2] sm:$0xff]
          %v765 = vld [vmem:[#allocation2 + $0x8] sm:$0xff]
          %v766 = vld [vmem:[#allocation5] sm:$0xff]
          %v767 = vld [vmem:[#allocation5 + $0x8] sm:$0xff]
          %v768 = vadd.f32 %v766, 1e-09
          %v769 = vadd.f32 %v767, 1e-09
          %v770 = vrcp.pop %v768
          %v771 = vrcp.pop %v769
          %773 = vset.pattern.permute.xlu0 32
          %774 = vperm.xlu0 %773, %v770
          %v775 = vpop.permute.xlu0 %774
          %778 = vset.pattern.permute.xlu0 32
          %779 = vperm.xlu0 %778, %v771
          %v780 = vpop.permute.xlu0 %779
          %v782 = vmul.f32 %v766, %v775
          %v783 = vmul.f32 %v767, %v780
          %v784 = vsub.f32 %v764, %v782
          %v785 = vsub.f32 %v765, %v783
          %v786 = vpack.c.bf16 %v785, %v784
          %v787 = vld [vmem:[#allocation11] sm:$0xf]
          %v788 = vld [vmem:[#allocation11 + $0x4] sm:$0xf]
          %v789 = vld [vmem:[#allocation11 + $0x8] sm:$0xf]
          %v790 = vld [vmem:[#allocation11 + $0xc] sm:$0xf]
          %v791 = vld [vmem:[%s7] sm:$0x1]
          %v793 = vperm.slane %v791, 0
          %v799 = vunpack.c.l.b16 %v787
          %v800 = vunpack.c.l.b16 %v788
          %v801 = vunpack.c.l.b16 %v789
          %v802 = vunpack.c.l.b16 %v790
          %v803 = vpack.c.b16 %v800, %v799
          %v804 = vpack.c.b16 %v802, %v801
          %vm807 = vcmask 261120
          %v809 = vsel %vm807, %v786, 0
          %811 = vmatpush.bf16.msra.mxu0 0
          %812 = vmatpush.bf16.msra.mxu0 0
          %813 = vmatpush.bf16.msra.mxu0 0
          %814 = vmatpush.bf16.msra.mxu0 0
          %815 = vmatpush.bf16.msra.mxu0 0
          %816 = vmatpush.bf16.msra.mxu0 0
          %817 = vmatpush.bf16.msra.mxu0 %v804
          %818 = vmatpush.bf16.msra.mxu0 %v803
          %819 = vmatmul.bf16.gmra.mxu0 %v809
          %v820 = vpop.f32.mrf.mxu0
          %v821 = vadd.f32 %v793, %v820
          %v822 = vpop.f32.mrf.mxu0
          %v823 = vadd.f32 %v793, %v822
          %824 = vdwg.mxu0
          %v825 = vmax.f32 %v821, 0.0
          %v826 = vmax.f32 %v823, 0.0
          %v827 = vadd.f32 %v764, %v825
          %v828 = vadd.f32 %v765, %v826
          %v829 = vld [vmem:[#allocation13] sm:$0xf]
          %v830 = vld [vmem:[#allocation13 + $0x4] sm:$0xf]
          %v831 = vld [vmem:[#allocation13 + $0x8] sm:$0xf]
          %v832 = vld [vmem:[#allocation13 + $0xc] sm:$0xf]
          %v833 = vpack.c.bf16 %v765, %v764
          %v834 = vld [vmem:[#allocation14] sm:$0xf]
          %v835 = vld [vmem:[#allocation14 + $0x4] sm:$0xf]
          %v836 = vld [vmem:[#allocation14 + $0x8] sm:$0xf]
          %v837 = vld [vmem:[#allocation14 + $0xc] sm:$0xf]
          %v838 = vpack.c.bf16 %v828, %v827
          %v843 = vunpack.c.l.b16 %v834
          %v844 = vunpack.c.l.b16 %v835
          %v845 = vunpack.c.l.b16 %v836
          %v846 = vunpack.c.l.b16 %v837
          %v847 = vpack.c.b16 %v844, %v843
          %v848 = vpack.c.b16 %v846, %v845
          %v850 = vsel %vm807, %v847, 0
          %v853 = vsel %vm807, %v848, 0
          %v856 = vsel %vm807, %v838, 0
          %858 = vmatpush.bf16.xpose.msra.mxu0 0
          %859 = vmatpush.bf16.xpose.msra.mxu0 0
          %860 = vmatpush.bf16.xpose.msra.mxu0 0
          %861 = vmatpush.bf16.xpose.msra.mxu0 0
          %862 = vmatpush.bf16.xpose.msra.mxu0 0
          %863 = vmatpush.bf16.xpose.msra.mxu0 0
          %864 = vmatpush.bf16.xpose.msra.mxu0 0
          %865 = vmatpush.bf16.xpose.msra.mxu0 %v856
          %866 = vmatmul.bf16.gmra.mxu0 %v850
          %v867 = vpop.f32.mrf.mxu0
          %v868 = vadd.f32 0.0, %v867
          %v869 = vpop.f32.mrf.mxu0
          %v870 = vadd.f32 0.0, %v869
          %871 = vmatmul.bf16.gmra.mxu0 %v853
          %v872 = vpop.f32.mrf.mxu0
          %v873 = vadd.f32 0.0, %v872
          %v874 = vpop.f32.mrf.mxu0
          %v875 = vadd.f32 0.0, %v874
          %876 = vdwg.mxu0
          %v881 = vunpack.c.l.b16 %v829
          %v882 = vunpack.c.l.b16 %v830
          %v883 = vunpack.c.l.b16 %v831
          %v884 = vunpack.c.l.b16 %v832
          %v885 = vpack.c.b16 %v882, %v881
          %v886 = vpack.c.b16 %v884, %v883
          %v888 = vsel %vm807, %v885, 0
          %v891 = vsel %vm807, %v886, 0
          %v894 = vsel %vm807, %v833, 0
          %896 = vmatpush.bf16.xpose.msra.mxu0 0
          %897 = vmatpush.bf16.xpose.msra.mxu0 0
          %898 = vmatpush.bf16.xpose.msra.mxu0 0
          %899 = vmatpush.bf16.xpose.msra.mxu0 0
          %900 = vmatpush.bf16.xpose.msra.mxu0 0
          %901 = vmatpush.bf16.xpose.msra.mxu0 0
          %902 = vmatpush.bf16.xpose.msra.mxu0 0
          %903 = vmatpush.bf16.xpose.msra.mxu0 %v894
          %904 = vmatmul.bf16.gmra.mxu0 %v888
          %v905 = vpop.f32.mrf.mxu0
          %v906 = vadd.f32 %v868, %v905
          %v907 = vpop.f32.mrf.mxu0
          %v908 = vadd.f32 %v870, %v907
          %909 = vmatmul.bf16.gmra.mxu0 %v891
          %v910 = vpop.f32.mrf.mxu0
          %v911 = vadd.f32 %v873, %v910
          %v912 = vpop.f32.mrf.mxu0
          %v913 = vadd.f32 %v875, %v912
          %914 = vdwg.mxu0
          %v915 = vld [vmem:[%s10] sm:$0xff]
          %v916 = vld [vmem:[%s10 + $0x8] sm:$0xff]
          %v917 = vld [vmem:[%s10 + $0x10] sm:$0xff]
          %v918 = vld [vmem:[%s10 + $0x18] sm:$0xff]
          %920 = vset.pattern.permute.xlu0 0
          %921 = vperm.xlu0 %920, %v915
          %v922 = vpop.permute.xlu0 %921
          %925 = vset.pattern.permute.xlu0 0
          %926 = vperm.xlu0 %925, %v916
          %v927 = vpop.permute.xlu0 %926
          %930 = vset.pattern.permute.xlu0 0
          %931 = vperm.xlu0 %930, %v917
          %v932 = vpop.permute.xlu0 %931
          %935 = vset.pattern.permute.xlu0 0
          %936 = vperm.xlu0 %935, %v918
          %v937 = vpop.permute.xlu0 %936
          %v939 = vadd.f32 %v906, %v922
          %v940 = vadd.f32 %v908, %v927
          %v941 = vadd.f32 %v911, %v932
          %v942 = vadd.f32 %v913, %v937
          %vm943 = vcmp.gt.f32.partialorder %v939, 0.0
          %vm944 = vcmp.gt.f32.partialorder %v940, 0.0
          %vm945 = vcmp.gt.f32.partialorder %v941, 0.0
          %vm946 = vcmp.gt.f32.partialorder %v942, 0.0
          %v947 = vmul.f32 %v939, 0.2
          %v948 = vmul.f32 %v940, 0.2
          %v949 = vmul.f32 %v941, 0.2
          %v950 = vmul.f32 %v942, 0.2
          %v951 = vsel %vm943, %v939, %v947
          %v952 = vsel %vm944, %v940, %v948
          %v953 = vsel %vm945, %v941, %v949
          %v954 = vsel %vm946, %v942, %v950
          %955 = vst.msk [vmem:[%s534] sm:$0xff] %vm693, %v951
          %956 = vst.msk [vmem:[%s534 + $0x8] sm:$0xff] %vm693, %v952
          %957 = vst.msk [vmem:[%s534 + $0x10] sm:$0xff] %vm693, %v953
          %958 = vst.msk [vmem:[%s534 + $0x18] sm:$0xff] %vm693, %v954
        $region96: #{tpu_custom_call.1} parent=63 // pred_fallthru
          _
        %p959 = scmp.lt.s32.totalorder %s32, 1
        %s960 = scalar_select %p959, %s32, 1
        %s961 = smul.addr %s960, 4
        %s962 = smul.addr %s961, 8
        %s963 = scalar_lea.vmem %s11, %s962
        // Predicated region
        $region97: #{tpu_custom_call.1} parent=63 // pred_check
          %p964 = pneg %p301
        $region98: #{tpu_custom_call.1} parent=63 // pred_check_branch
          %966 = sbr.rel (%p964) target = $region100
        $region99: #{tpu_custom_call.1} parent=63 // pred_region
          _
        $region100: #{tpu_custom_call.1} parent=63 // pred_fallthru
          _
      $region64: #{tpu_custom_call.1} parent=5 // pred_fallthru
        _
      %p967 = scmp.le.s32.totalorder 2, %s23
      // Predicated region
      $region101: #{tpu_custom_call.1} parent=5 // pred_check
        %p968 = pneg %p967
      $region102: #{tpu_custom_call.1} parent=5 // pred_check_branch
        %970 = sbr.rel (%p968) target = $region104
      $region103: #{tpu_custom_call.1} parent=5 // pred_region
        %s971 = ssub.s32 %s23, 2
        // Predicated region
        $region105: #{tpu_custom_call.1} parent=103 // pred_check
          %p972 = pneg %p307
        $region106: #{tpu_custom_call.1} parent=103 // pred_check_branch
          %974 = sbr.rel (%p972) target = $region108
        $region107: #{tpu_custom_call.1} parent=103 // pred_region
          %p975 = scmp.lt.s32.totalorder %s34, 1
          %s976 = scalar_select %p975, %s34, 1
          %s977 = smul.addr %s976, 4
          %s978 = smul.addr %s977, 8
          %s979 = scalar_lea.vmem %s11, %s978
        $region108: #{tpu_custom_call.1} parent=103 // pred_fallthru
          _
      $region104: #{tpu_custom_call.1} parent=5 // pred_fallthru
        _
    $region6: #{tpu_custom_call.1} parent=1 // loop_footer
      %s27 = sadd.s32 1, %s23
    $region7: #{tpu_custom_call.1} parent=1 // loop_footer_branch
      %22 = sbr.rel target = $region3
    $region8: #{tpu_custom_call.1} parent=1 // loop_exit
      _
    %980 = vsyncpa [#allocation7], 1
    %s981 = scalar_lea.sflag [#allocation7], 1
    %982 = vsyncpa %s981, 1
    %983 = vsyncpa [#allocation9], 1
    %984 = vsyncpa [#allocation12], 1
    %985 = vsyncpa [#allocation15], 1

</llo_original>
